<compile_context>
chip_gen: v5e
topology: v5e:2x2
jax: 0.10.0
libtpu: 0.0.40
codegen_flags: <defaults>
</compile_context>

<pallas_src>
import math
import functools
import numpy as np

import jax
import jax.numpy as jnp
from jax.experimental import pallas as pl
from jax.experimental.pallas import tpu as pltpu

IMAGE_WIDTH = 128
N_CH = 2
N_ANGLES = 64
N_DET = 128
T_STEPS = 100

# Synthetic "global normalisation" constants (the DC class attributes in torch).
PHAN0_MIN, PHAN0_MAX = -0.1, 1.2
PHAN1_MIN, PHAN1_MAX = 0.0, 0.8
SINO_UT_MIN, SINO_UT_MAX = -5.0, 5.0
CH_W0, CH_W1 = 1.0, 0.5           # synthetic channel mixing of the forward operator
RESIDUAL_CONST = 0.005
STOCHASTIC_PROPORTION = 0.25

_S0 = 0.5 * (PHAN0_MAX - PHAN0_MIN)
_S1 = 0.5 * (PHAN1_MAX - PHAN1_MIN)
_K_CONST = CH_W0 * (_S0 + PHAN0_MIN) + CH_W1 * (_S1 + PHAN1_MIN)

MAX_SAMPLES_PER_STEP = 8   # gather buffers: 3 * KB * 128 KiB <= 3 MiB VMEM


def make_gaussian_forward_process(t_steps=T_STEPS):
    """Deterministic diffusion schedule (stand-in for GaussianForwardProcess)."""
    betas = jnp.linspace(1e-4, 2e-2, t_steps, dtype=jnp.float32)
    alphas = 1.0 - betas
    acp = jnp.cumprod(alphas)
    acp_prev = jnp.concatenate([jnp.ones((1,), jnp.float32), acp[:-1]])
    alphas_cumprod_sqrt = jnp.sqrt(acp)
    alphas_one_minus_cumprod_sqrt = jnp.sqrt(1.0 - acp)
    post_var = betas * (1.0 - acp_prev) / (1.0 - acp)
    post_var_clipped = jnp.maximum(post_var, post_var[1])
    return alphas_cumprod_sqrt, alphas_one_minus_cumprod_sqrt, post_var_clipped


# --------------------------------------------------------------------------- #
# Fused kernel: manual DMA gather of KB selected samples, fused affine chain,
# stacked forward-operator matmuls, per-block partial log-likelihood sum.
# --------------------------------------------------------------------------- #
def _fused_physics_kernel(idx_ref, coef_ref, xt_hbm, tp_hbm, gt_hbm,
                          p_ref, q_ref, out_ref,
                          xt_buf, tp_buf, gt_buf, sems, *, kb):
    g = pl.program_id(0)
    base = g * kb

    # Gather the kb selected samples of this block straight from HBM; issue all
    # copies first so they overlap, then wait.
    for j in range(kb):
        b = idx_ref[base + j]
        pltpu.make_async_copy(xt_hbm.at[b], xt_buf.at[j], sems.at[0, j]).start()
        pltpu.make_async_copy(tp_hbm.at[b], tp_buf.at[j], sems.at[1, j]).start()
        pltpu.make_async_copy(gt_hbm.at[b], gt_buf.at[j], sems.at[2, j]).start()
    for j in range(kb):
        pltpu.make_async_copy(xt_hbm.at[0], xt_buf.at[j], sems.at[0, j]).wait()
        pltpu.make_async_copy(tp_hbm.at[0], tp_buf.at[j], sems.at[1, j]).wait()
        pltpu.make_async_copy(gt_hbm.at[0], gt_buf.at[j], sems.at[2, j]).wait()

    # Fused affine chain: x0 reconstruction + phantom de-norm + channel mixing
    # + gt mixing folded into one expression (per-sample scalars from SMEM).
    # Difference images are stacked along lanes -> one wide MXU matmul with P.
    diffs = []
    c2s = []
    c3s = []
    for j in range(kb):
        row = base + j
        k0 = coef_ref[row, 0]
        k1 = coef_ref[row, 1]
        k2 = coef_ref[row, 2]
        k3 = coef_ref[row, 3]
        c2s.append(coef_ref[row, 4])
        c3s.append(coef_ref[row, 5])
        d = (k0 * xt_buf[j, 0] + k1 * xt_buf[j, 1]
             + k2 * tp_buf[j, 0] + k3 * tp_buf[j, 1]
             - CH_W0 * gt_buf[j, 0] - CH_W1 * gt_buf[j, 1]
             + _K_CONST)
        diffs.append(d.astype(jnp.bfloat16))

    stacked = diffs[0] if kb == 1 else jnp.concatenate(diffs, axis=1)  # (H, kb*W)
    pd = jnp.dot(p_ref[...], stacked, preferred_element_type=jnp.float32)

    # Per-sample second matmul + squared-error log-likelihood.
    #   ll_mean_j = c3_j - c2_j * sum((P @ diff_j @ Q)^2)
    # (|x| dropped since only the square is used; scale^2, 1/(2 var) and the
    #  mean are folded into c2 on the host; padded rows have c2 = c3 = 0.)
    acc = jnp.float32(0.0)
    for j in range(kb):
        blk = pd[:, j * IMAGE_WIDTH:(j + 1) * IMAGE_WIDTH].astype(jnp.bfloat16)
        sino = jnp.dot(blk, q_ref[...], preferred_element_type=jnp.float32)
        s = jnp.sum(sino * sino)
        acc = acc + (c3s[j] - s * c2s[j])

    out_ref[g] = acc


def _fused_physics_ll_partials(indices, coefs, x_t, target_pred, gt,
                               p_bf, q_bf, *, kb, n_blocks):
    _, C, H, W = x_t.shape
    smem = pl.BlockSpec(memory_space=pltpu.MemorySpace.SMEM)
    hbm = pl.BlockSpec(memory_space=pl.ANY)

    grid_spec = pltpu.PrefetchScalarGridSpec(
        num_scalar_prefetch=1,                 # selected-sample indices in SMEM
        grid=(n_blocks,),
        in_specs=[
            smem,                              # coef table (k_pad, 8) f32
            hbm, hbm, hbm,                     # x_t, target_pred, gt (raw HBM)
            pl.BlockSpec((N_ANGLES, H), lambda g, idx: (0, 0)),   # P (bf16, resident)
            pl.BlockSpec((W, N_DET), lambda g, idx: (0, 0)),      # Q (bf16, resident)
        ],
        out_specs=pl.BlockSpec(memory_space=pltpu.MemorySpace.SMEM),
        scratch_shapes=[
            pltpu.VMEM((kb, C, H, W), jnp.float32),   # x_t gather buffer
            pltpu.VMEM((kb, C, H, W), jnp.float32),   # target_pred gather buffer
            pltpu.VMEM((kb, C, H, W), jnp.float32),   # gt gather buffer
            pltpu.SemaphoreType.DMA((3, kb)),
        ],
    )
    return pl.pallas_call(
        functools.partial(_fused_physics_kernel, kb=kb),
        out_shape=jax.ShapeDtypeStruct((n_blocks,), jnp.float32),
        grid_spec=grid_spec,
        compiler_params=pltpu.CompilerParams(
            dimension_semantics=("arbitrary",)),
    )(indices, coefs, x_t, target_pred, gt, p_bf, q_bf)


# --------------------------------------------------------------------------- #
# Wrapper == PhysicsIncorporated.forward (one jit: scalar prep + kernel + sum)
# --------------------------------------------------------------------------- #
@functools.partial(jax.jit, static_argnames=("predict_mode",))
def physics_incorporated_forward(x_t, target_pred, t, gt,
                                 a_sqrt, om_sqrt, post_var, P, Q, key,
                                 predict_mode="eps"):
    B = x_t.shape[0]

    # torch.randperm(B)[: floor(B/4)]  -> deterministic jax permutation
    n_sel = max(1, math.floor(B * STOCHASTIC_PROPORTION))
    indices = jax.random.permutation(key, B)[:n_sel].astype(jnp.int32)

    # Inputs are generated at the native 128x128 resolution, so the
    # F.interpolate branches are no-ops here.
    # TODO(synk): bilinear resize path for inputs whose spatial size != 128.

    t_sel = t[indices]
    a_sel = a_sqrt[t_sel]           # sqrt(alphas_cumprod)[t]
    om_sel = om_sqrt[t_sel]         # sqrt(1 - alphas_cumprod)[t]
    var_sel = post_var[t_sel]       # posterior_variance_clipped[t]

    # x0 = a_coef * x_t + b_coef * target_pred  (per predict_mode)
    if predict_mode == "eps":
        a_coef = 1.0 / a_sel
        b_coef = -om_sel / a_sel
    elif predict_mode == "x0":
        a_coef = jnp.zeros_like(a_sel)
        b_coef = jnp.ones_like(a_sel)
    elif predict_mode == "v":
        a_coef = a_sel
        b_coef = -om_sel
    else:
        raise ValueError(f"unknown predict_mode {predict_mode}")

    scale = 2.0 / (SINO_UT_MAX - SINO_UT_MIN)
    n_elems = float(N_ANGLES * N_DET)
    k0 = (CH_W0 * _S0) * a_coef
    k1 = (CH_W1 * _S1) * a_coef
    k2 = (CH_W0 * _S0) * b_coef
    k3 = (CH_W1 * _S1) * b_coef
    c2 = (scale * scale) / (2.0 * var_sel * n_elems)    # folds mean + 1/(2 var)
    c3 = -0.5 * jnp.log(2.0 * jnp.pi * var_sel)         # Gaussian log-norm term
    zeros = jnp.zeros_like(c2)
    coefs = jnp.stack([k0, k1, k2, k3, c2, c3, zeros, zeros],
                      axis=1).astype(jnp.float32)       # (n_sel, 8)

    kb = min(n_sel, MAX_SAMPLES_PER_STEP)
    n_blocks = -(-n_sel // kb)
    k_pad = n_blocks * kb
    if k_pad != n_sel:
        pad = k_pad - n_sel
        indices = jnp.concatenate([indices, jnp.zeros((pad,), jnp.int32)])
        coefs = jnp.concatenate([coefs, jnp.zeros((pad, 8), jnp.float32)], axis=0)

    partials = _fused_physics_ll_partials(
        indices, coefs, x_t, target_pred, gt,
        P.astype(jnp.bfloat16), Q.astype(jnp.bfloat16),
        kb=kb, n_blocks=n_blocks)

    # residual_i = RESIDUAL_CONST * (-ll_mean_i);  loss = sum_i residual_i / B
    return (RESIDUAL_CONST / B) * (-jnp.sum(partials))


# Pure-JAX reference (mirrors the torch module's arithmetic, no simplifications).
def reference_forward(x_t, target_pred, t, gt, gfp, P, Q, key, predict_mode="eps"):
    a_sqrt, om_sqrt, post_var = gfp
    B = x_t.shape[0]
    n_sel = max(1, math.floor(B * STOCHASTIC_PROPORTION))
    indices = np.asarray(jax.random.permutation(key, B)[:n_sel])
    a = a_sqrt[t][:, None, None, None]
    om = om_sqrt[t][:, None, None, None]
    if predict_mode == "eps":
        x0p = (x_t - om * target_pred) / a
    elif predict_mode == "x0":
        x0p = target_pred
    else:
        x0p = a * x_t - om * target_pred
    loss_total = jnp.float32(0.0)
    for i in indices:
        x0 = x0p[i]
        ch0 = (x0[0] + 1.0) * 0.5 * (PHAN0_MAX - PHAN0_MIN) + PHAN0_MIN
        ch1 = (x0[1] + 1.0) * 0.5 * (PHAN1_MAX - PHAN1_MIN) + PHAN1_MIN
        img_pred = CH_W0 * ch0 + CH_W1 * ch1
        img_gt = CH_W0 * gt[i, 0] + CH_W1 * gt[i, 1]
        sp = P @ img_pred @ Q
        sg = P @ img_gt @ Q
        sp = (sp - SINO_UT_MIN) / (SINO_UT_MAX - SINO_UT_MIN) * 2.0 - 1.0
        sg = (sg - SINO_UT_MIN) / (SINO_UT_MAX - SINO_UT_MIN) * 2.0 - 1.0
        loss = jnp.abs(sp - sg)
        var = post_var[t[i]]
        ll = -0.5 * jnp.log(2.0 * jnp.pi * var) - loss * loss / (2.0 * var)
        loss_total = loss_total + RESIDUAL_CONST * (-jnp.mean(ll)) * (1.0 / B)
    return loss_total


if __name__ == "__main__":
    key = jax.random.PRNGKey(0)
    k_xt, k_tp, k_gt, k_t, k_perm, k_P, k_Q = jax.random.split(key, 7)

    B = 4
    x_t = jax.random.normal(k_xt, (B, N_CH, IMAGE_WIDTH, IMAGE_WIDTH), jnp.float32)
    target_pred = jax.random.normal(k_tp, (B, N_CH, IMAGE_WIDTH, IMAGE_WIDTH), jnp.float32)
    gt = jax.random.normal(k_gt, (B, N_CH, IMAGE_WIDTH, IMAGE_WIDTH), jnp.float32)
    t = jax.random.randint(k_t, (B,), 1, T_STEPS)

    # Deterministic synthetic forward-operator matrices (stand-in for DC.A_ut).
    P = jax.random.normal(k_P, (N_ANGLES, IMAGE_WIDTH), jnp.float32) / np.sqrt(IMAGE_WIDTH)
    Q = jax.random.normal(k_Q, (IMAGE_WIDTH, N_DET), jnp.float32) / np.sqrt(IMAGE_WIDTH)

    a_sqrt, om_sqrt, post_var = make_gaussian_forward_process()

    loss = physics_incorporated_forward(
        x_t, target_pred, t, gt, a_sqrt, om_sqrt, post_var, P, Q, k_perm,
        predict_mode="eps")
    loss = jax.block_until_ready(loss)

    ref = jax.block_until_ready(
        reference_forward(x_t, target_pred, t, gt, (a_sqrt, om_sqrt, post_var),
                          P, Q, k_perm, "eps"))

    assert np.isfinite(float(loss)), "kernel produced non-finite loss"
    np.testing.assert_allclose(float(loss), float(ref), rtol=5e-2, atol=1e-4)
    print("KERNEL_OK")
</pallas_src>

<mosaic_0001>
module attributes {stable_mosaic.version = 11 : i64} {
  func.func @_fused_physics_kernel(%arg0: i32, %arg1: memref<1xi32, #tpu.memory_space<smem>>, %arg2: memref<1x8xf32, #tpu.memory_space<smem>>, %arg3: memref<4x2x128x128xf32, #tpu.memory_space<any>>, %arg4: memref<4x2x128x128xf32, #tpu.memory_space<any>>, %arg5: memref<4x2x128x128xf32, #tpu.memory_space<any>>, %arg6: memref<64x128xbf16, #tpu.memory_space<vmem>>, %arg7: memref<128x128xbf16, #tpu.memory_space<vmem>>, %arg8: memref<1xf32, #tpu.memory_space<smem>>, %arg9: memref<1x2x128x128xf32, #tpu.memory_space<vmem>>, %arg10: memref<1x2x128x128xf32, #tpu.memory_space<vmem>>, %arg11: memref<1x2x128x128xf32, #tpu.memory_space<vmem>>, %arg12: memref<3x1x!tpu.dma_semaphore, #tpu.memory_space<semaphore_mem>>) attributes {dimension_semantics = [#tpu.dimension_semantics<arbitrary>], iteration_bounds = array<i64: 1>, scalar_prefetch = 1 : i64, scratch_operands = 4 : i64, tpu.core_type = #tpu.core_type<tc>, window_params = [{transform_indices = @transform_0, window_bounds = array<i64: 1, 8>}, {}, {}, {}, {pipeline_mode = #tpu.pipeline_mode<synchronous>, transform_indices = @transform_4, window_bounds = array<i64: 64, 128>}, {pipeline_mode = #tpu.pipeline_mode<synchronous>, transform_indices = @transform_5, window_bounds = array<i64: 128, 128>}, {transform_indices = @transform_6, window_bounds = array<i64: 1>}]} {
    %c1_i32 = arith.constant 1 : i32
    %0 = arith.muli %arg0, %c1_i32 : i32
    %c0_i32 = arith.constant 0 : i32
    %1 = arith.addi %0, %c0_i32 : i32
    %2 = arith.index_cast %1 : i32 to index
    %3 = memref.load %arg1[%2] : memref<1xi32, #tpu.memory_space<smem>>
    %c0_i32_0 = arith.constant 0 : i32
    %c0_i32_1 = arith.constant 0 : i32
    %c0_i32_2 = arith.constant 0 : i32
    %c0_i32_3 = arith.constant 0 : i32
    %c0_i32_4 = arith.constant 0 : i32
    %c0_i32_5 = arith.constant 0 : i32
    %4 = tpu.memref_slice %arg3[%3, %c0_i32_3, %c0_i32_4, %c0_i32_5] : memref<4x2x128x128xf32, #tpu.memory_space<any>> -> memref<1x2x128x128xf32, #tpu.memory_space<any>>
    %5 = tpu.memref_squeeze %4 : memref<1x2x128x128xf32, #tpu.memory_space<any>> -> memref<2x128x128xf32, #tpu.memory_space<any>>
    %c0_i32_6 = arith.constant 0 : i32
    %c0_i32_7 = arith.constant 0 : i32
    %c0_i32_8 = arith.constant 0 : i32
    %6 = tpu.memref_slice %arg9[%c0_i32_0, %c0_i32_6, %c0_i32_7, %c0_i32_8] : memref<1x2x128x128xf32, #tpu.memory_space<vmem>> -> memref<1x2x128x128xf32, #tpu.memory_space<vmem>>
    %7 = tpu.memref_squeeze %6 : memref<1x2x128x128xf32, #tpu.memory_space<vmem>> -> memref<2x128x128xf32, #tpu.memory_space<vmem>>
    %8 = tpu.memref_slice %arg12[%c0_i32_1, %c0_i32_2] : memref<3x1x!tpu.dma_semaphore, #tpu.memory_space<semaphore_mem>> -> memref<1x1x!tpu.dma_semaphore, #tpu.memory_space<semaphore_mem>>
    %9 = tpu.memref_squeeze %8 : memref<1x1x!tpu.dma_semaphore, #tpu.memory_space<semaphore_mem>> -> memref<!tpu.dma_semaphore, #tpu.memory_space<semaphore_mem>>
    tpu.enqueue_dma source(%5 : memref<2x128x128xf32, #tpu.memory_space<any>>) target(%7 : memref<2x128x128xf32, #tpu.memory_space<vmem>>) target_semaphore(%9 : memref<!tpu.dma_semaphore, #tpu.memory_space<semaphore_mem>>)
    %c0_i32_9 = arith.constant 0 : i32
    %c1_i32_10 = arith.constant 1 : i32
    %c0_i32_11 = arith.constant 0 : i32
    %c0_i32_12 = arith.constant 0 : i32
    %c0_i32_13 = arith.constant 0 : i32
    %c0_i32_14 = arith.constant 0 : i32
    %10 = tpu.memref_slice %arg4[%3, %c0_i32_12, %c0_i32_13, %c0_i32_14] : memref<4x2x128x128xf32, #tpu.memory_space<any>> -> memref<1x2x128x128xf32, #tpu.memory_space<any>>
    %11 = tpu.memref_squeeze %10 : memref<1x2x128x128xf32, #tpu.memory_space<any>> -> memref<2x128x128xf32, #tpu.memory_space<any>>
    %c0_i32_15 = arith.constant 0 : i32
    %c0_i32_16 = arith.constant 0 : i32
    %c0_i32_17 = arith.constant 0 : i32
    %12 = tpu.memref_slice %arg10[%c0_i32_9, %c0_i32_15, %c0_i32_16, %c0_i32_17] : memref<1x2x128x128xf32, #tpu.memory_space<vmem>> -> memref<1x2x128x128xf32, #tpu.memory_space<vmem>>
    %13 = tpu.memref_squeeze %12 : memref<1x2x128x128xf32, #tpu.memory_space<vmem>> -> memref<2x128x128xf32, #tpu.memory_space<vmem>>
    %14 = tpu.memref_slice %arg12[%c1_i32_10, %c0_i32_11] : memref<3x1x!tpu.dma_semaphore, #tpu.memory_space<semaphore_mem>> -> memref<1x1x!tpu.dma_semaphore, #tpu.memory_space<semaphore_mem>>
    %15 = tpu.memref_squeeze %14 : memref<1x1x!tpu.dma_semaphore, #tpu.memory_space<semaphore_mem>> -> memref<!tpu.dma_semaphore, #tpu.memory_space<semaphore_mem>>
    tpu.enqueue_dma source(%11 : memref<2x128x128xf32, #tpu.memory_space<any>>) target(%13 : memref<2x128x128xf32, #tpu.memory_space<vmem>>) target_semaphore(%15 : memref<!tpu.dma_semaphore, #tpu.memory_space<semaphore_mem>>)
    %c0_i32_18 = arith.constant 0 : i32
    %c2_i32 = arith.constant 2 : i32
    %c0_i32_19 = arith.constant 0 : i32
    %c0_i32_20 = arith.constant 0 : i32
    %c0_i32_21 = arith.constant 0 : i32
    %c0_i32_22 = arith.constant 0 : i32
    %16 = tpu.memref_slice %arg5[%3, %c0_i32_20, %c0_i32_21, %c0_i32_22] : memref<4x2x128x128xf32, #tpu.memory_space<any>> -> memref<1x2x128x128xf32, #tpu.memory_space<any>>
    %17 = tpu.memref_squeeze %16 : memref<1x2x128x128xf32, #tpu.memory_space<any>> -> memref<2x128x128xf32, #tpu.memory_space<any>>
    %c0_i32_23 = arith.constant 0 : i32
    %c0_i32_24 = arith.constant 0 : i32
    %c0_i32_25 = arith.constant 0 : i32
    %18 = tpu.memref_slice %arg11[%c0_i32_18, %c0_i32_23, %c0_i32_24, %c0_i32_25] : memref<1x2x128x128xf32, #tpu.memory_space<vmem>> -> memref<1x2x128x128xf32, #tpu.memory_space<vmem>>
    %19 = tpu.memref_squeeze %18 : memref<1x2x128x128xf32, #tpu.memory_space<vmem>> -> memref<2x128x128xf32, #tpu.memory_space<vmem>>
    %20 = tpu.memref_slice %arg12[%c2_i32, %c0_i32_19] : memref<3x1x!tpu.dma_semaphore, #tpu.memory_space<semaphore_mem>> -> memref<1x1x!tpu.dma_semaphore, #tpu.memory_space<semaphore_mem>>
    %21 = tpu.memref_squeeze %20 : memref<1x1x!tpu.dma_semaphore, #tpu.memory_space<semaphore_mem>> -> memref<!tpu.dma_semaphore, #tpu.memory_space<semaphore_mem>>
    tpu.enqueue_dma source(%17 : memref<2x128x128xf32, #tpu.memory_space<any>>) target(%19 : memref<2x128x128xf32, #tpu.memory_space<vmem>>) target_semaphore(%21 : memref<!tpu.dma_semaphore, #tpu.memory_space<semaphore_mem>>)
    %c0_i32_26 = arith.constant 0 : i32
    %c0_i32_27 = arith.constant 0 : i32
    %c0_i32_28 = arith.constant 0 : i32
    %c0_i32_29 = arith.constant 0 : i32
    %c0_i32_30 = arith.constant 0 : i32
    %c0_i32_31 = arith.constant 0 : i32
    %c0_i32_32 = arith.constant 0 : i32
    %22 = tpu.memref_slice %arg3[%c0_i32_26, %c0_i32_30, %c0_i32_31, %c0_i32_32] : memref<4x2x128x128xf32, #tpu.memory_space<any>> -> memref<1x2x128x128xf32, #tpu.memory_space<any>>
    %23 = tpu.memref_squeeze %22 : memref<1x2x128x128xf32, #tpu.memory_space<any>> -> memref<2x128x128xf32, #tpu.memory_space<any>>
    %c0_i32_33 = arith.constant 0 : i32
    %c0_i32_34 = arith.constant 0 : i32
    %c0_i32_35 = arith.constant 0 : i32
    %24 = tpu.memref_slice %arg9[%c0_i32_27, %c0_i32_33, %c0_i32_34, %c0_i32_35] : memref<1x2x128x128xf32, #tpu.memory_space<vmem>> -> memref<1x2x128x128xf32, #tpu.memory_space<vmem>>
    %25 = tpu.memref_squeeze %24 : memref<1x2x128x128xf32, #tpu.memory_space<vmem>> -> memref<2x128x128xf32, #tpu.memory_space<vmem>>
    %26 = tpu.memref_slice %arg12[%c0_i32_28, %c0_i32_29] : memref<3x1x!tpu.dma_semaphore, #tpu.memory_space<semaphore_mem>> -> memref<1x1x!tpu.dma_semaphore, #tpu.memory_space<semaphore_mem>>
    %27 = tpu.memref_squeeze %26 : memref<1x1x!tpu.dma_semaphore, #tpu.memory_space<semaphore_mem>> -> memref<!tpu.dma_semaphore, #tpu.memory_space<semaphore_mem>>
    tpu.wait_dma2 semaphore(%27 : memref<!tpu.dma_semaphore, #tpu.memory_space<semaphore_mem>>) src(%23 : memref<2x128x128xf32, #tpu.memory_space<any>>) dst(%25 : memref<2x128x128xf32, #tpu.memory_space<vmem>>)
    %c0_i32_36 = arith.constant 0 : i32
    %c0_i32_37 = arith.constant 0 : i32
    %c1_i32_38 = arith.constant 1 : i32
    %c0_i32_39 = arith.constant 0 : i32
    %c0_i32_40 = arith.constant 0 : i32
    %c0_i32_41 = arith.constant 0 : i32
    %c0_i32_42 = arith.constant 0 : i32
    %28 = tpu.memref_slice %arg4[%c0_i32_36, %c0_i32_40, %c0_i32_41, %c0_i32_42] : memref<4x2x128x128xf32, #tpu.memory_space<any>> -> memref<1x2x128x128xf32, #tpu.memory_space<any>>
    %29 = tpu.memref_squeeze %28 : memref<1x2x128x128xf32, #tpu.memory_space<any>> -> memref<2x128x128xf32, #tpu.memory_space<any>>
    %c0_i32_43 = arith.constant 0 : i32
    %c0_i32_44 = arith.constant 0 : i32
    %c0_i32_45 = arith.constant 0 : i32
    %30 = tpu.memref_slice %arg10[%c0_i32_37, %c0_i32_43, %c0_i32_44, %c0_i32_45] : memref<1x2x128x128xf32, #tpu.memory_space<vmem>> -> memref<1x2x128x128xf32, #tpu.memory_space<vmem>>
    %31 = tpu.memref_squeeze %30 : memref<1x2x128x128xf32, #tpu.memory_space<vmem>> -> memref<2x128x128xf32, #tpu.memory_space<vmem>>
    %32 = tpu.memref_slice %arg12[%c1_i32_38, %c0_i32_39] : memref<3x1x!tpu.dma_semaphore, #tpu.memory_space<semaphore_mem>> -> memref<1x1x!tpu.dma_semaphore, #tpu.memory_space<semaphore_mem>>
    %33 = tpu.memref_squeeze %32 : memref<1x1x!tpu.dma_semaphore, #tpu.memory_space<semaphore_mem>> -> memref<!tpu.dma_semaphore, #tpu.memory_space<semaphore_mem>>
    tpu.wait_dma2 semaphore(%33 : memref<!tpu.dma_semaphore, #tpu.memory_space<semaphore_mem>>) src(%29 : memref<2x128x128xf32, #tpu.memory_space<any>>) dst(%31 : memref<2x128x128xf32, #tpu.memory_space<vmem>>)
    %c0_i32_46 = arith.constant 0 : i32
    %c0_i32_47 = arith.constant 0 : i32
    %c2_i32_48 = arith.constant 2 : i32
    %c0_i32_49 = arith.constant 0 : i32
    %c0_i32_50 = arith.constant 0 : i32
    %c0_i32_51 = arith.constant 0 : i32
    %c0_i32_52 = arith.constant 0 : i32
    %34 = tpu.memref_slice %arg5[%c0_i32_46, %c0_i32_50, %c0_i32_51, %c0_i32_52] : memref<4x2x128x128xf32, #tpu.memory_space<any>> -> memref<1x2x128x128xf32, #tpu.memory_space<any>>
    %35 = tpu.memref_squeeze %34 : memref<1x2x128x128xf32, #tpu.memory_space<any>> -> memref<2x128x128xf32, #tpu.memory_space<any>>
    %c0_i32_53 = arith.constant 0 : i32
    %c0_i32_54 = arith.constant 0 : i32
    %c0_i32_55 = arith.constant 0 : i32
    %36 = tpu.memref_slice %arg11[%c0_i32_47, %c0_i32_53, %c0_i32_54, %c0_i32_55] : memref<1x2x128x128xf32, #tpu.memory_space<vmem>> -> memref<1x2x128x128xf32, #tpu.memory_space<vmem>>
    %37 = tpu.memref_squeeze %36 : memref<1x2x128x128xf32, #tpu.memory_space<vmem>> -> memref<2x128x128xf32, #tpu.memory_space<vmem>>
    %38 = tpu.memref_slice %arg12[%c2_i32_48, %c0_i32_49] : memref<3x1x!tpu.dma_semaphore, #tpu.memory_space<semaphore_mem>> -> memref<1x1x!tpu.dma_semaphore, #tpu.memory_space<semaphore_mem>>
    %39 = tpu.memref_squeeze %38 : memref<1x1x!tpu.dma_semaphore, #tpu.memory_space<semaphore_mem>> -> memref<!tpu.dma_semaphore, #tpu.memory_space<semaphore_mem>>
    tpu.wait_dma2 semaphore(%39 : memref<!tpu.dma_semaphore, #tpu.memory_space<semaphore_mem>>) src(%35 : memref<2x128x128xf32, #tpu.memory_space<any>>) dst(%37 : memref<2x128x128xf32, #tpu.memory_space<vmem>>)
    %c0_i32_56 = arith.constant 0 : i32
    %40 = arith.addi %0, %c0_i32_56 : i32
    %41 = arith.index_cast %40 : i32 to index
    %c0 = arith.constant 0 : index
    %42 = memref.load %arg2[%41, %c0] : memref<1x8xf32, #tpu.memory_space<smem>>
    %43 = arith.index_cast %40 : i32 to index
    %c1 = arith.constant 1 : index
    %44 = memref.load %arg2[%43, %c1] : memref<1x8xf32, #tpu.memory_space<smem>>
    %45 = arith.index_cast %40 : i32 to index
    %c2 = arith.constant 2 : index
    %46 = memref.load %arg2[%45, %c2] : memref<1x8xf32, #tpu.memory_space<smem>>
    %47 = arith.index_cast %40 : i32 to index
    %c3 = arith.constant 3 : index
    %48 = memref.load %arg2[%47, %c3] : memref<1x8xf32, #tpu.memory_space<smem>>
    %49 = arith.index_cast %40 : i32 to index
    %c4 = arith.constant 4 : index
    %50 = memref.load %arg2[%49, %c4] : memref<1x8xf32, #tpu.memory_space<smem>>
    %51 = arith.index_cast %40 : i32 to index
    %c5 = arith.constant 5 : index
    %52 = memref.load %arg2[%51, %c5] : memref<1x8xf32, #tpu.memory_space<smem>>
    %c0_57 = arith.constant 0 : index
    %c0_58 = arith.constant 0 : index
    %c0_59 = arith.constant 0 : index
    %c0_60 = arith.constant 0 : index
    %53 = vector.load %arg9[%c0_57, %c0_58, %c0_59, %c0_60] : memref<1x2x128x128xf32, #tpu.memory_space<vmem>>, vector<1x1x128x128xf32>
    %54 = vector.shape_cast %53 : vector<1x1x128x128xf32> to vector<128x128xf32>
    %55 = vector.broadcast %42 : f32 to vector<128x128xf32>
    %56 = arith.mulf %55, %54 : vector<128x128xf32>
    %c0_61 = arith.constant 0 : index
    %c1_62 = arith.constant 1 : index
    %c0_63 = arith.constant 0 : index
    %c0_64 = arith.constant 0 : index
    %57 = vector.load %arg9[%c0_61, %c1_62, %c0_63, %c0_64] : memref<1x2x128x128xf32, #tpu.memory_space<vmem>>, vector<1x1x128x128xf32>
    %58 = vector.shape_cast %57 : vector<1x1x128x128xf32> to vector<128x128xf32>
    %59 = vector.broadcast %44 : f32 to vector<128x128xf32>
    %60 = arith.mulf %59, %58 : vector<128x128xf32>
    %61 = arith.addf %56, %60 : vector<128x128xf32>
    %c0_65 = arith.constant 0 : index
    %c0_66 = arith.constant 0 : index
    %c0_67 = arith.constant 0 : index
    %c0_68 = arith.constant 0 : index
    %62 = vector.load %arg10[%c0_65, %c0_66, %c0_67, %c0_68] : memref<1x2x128x128xf32, #tpu.memory_space<vmem>>, vector<1x1x128x128xf32>
    %63 = vector.shape_cast %62 : vector<1x1x128x128xf32> to vector<128x128xf32>
    %64 = vector.broadcast %46 : f32 to vector<128x128xf32>
    %65 = arith.mulf %64, %63 : vector<128x128xf32>
    %66 = arith.addf %61, %65 : vector<128x128xf32>
    %c0_69 = arith.constant 0 : index
    %c1_70 = arith.constant 1 : index
    %c0_71 = arith.constant 0 : index
    %c0_72 = arith.constant 0 : index
    %67 = vector.load %arg10[%c0_69, %c1_70, %c0_71, %c0_72] : memref<1x2x128x128xf32, #tpu.memory_space<vmem>>, vector<1x1x128x128xf32>
    %68 = vector.shape_cast %67 : vector<1x1x128x128xf32> to vector<128x128xf32>
    %69 = vector.broadcast %48 : f32 to vector<128x128xf32>
    %70 = arith.mulf %69, %68 : vector<128x128xf32>
    %71 = arith.addf %66, %70 : vector<128x128xf32>
    %c0_73 = arith.constant 0 : index
    %c0_74 = arith.constant 0 : index
    %c0_75 = arith.constant 0 : index
    %c0_76 = arith.constant 0 : index
    %72 = vector.load %arg11[%c0_73, %c0_74, %c0_75, %c0_76] : memref<1x2x128x128xf32, #tpu.memory_space<vmem>>, vector<1x1x128x128xf32>
    %73 = vector.shape_cast %72 : vector<1x1x128x128xf32> to vector<128x128xf32>
    %cst = arith.constant 1.000000e+00 : f32
    %74 = vector.broadcast %cst : f32 to vector<128x128xf32>
    %75 = arith.mulf %74, %73 : vector<128x128xf32>
    %76 = arith.subf %71, %75 : vector<128x128xf32>
    %c0_77 = arith.constant 0 : index
    %c1_78 = arith.constant 1 : index
    %c0_79 = arith.constant 0 : index
    %c0_80 = arith.constant 0 : index
    %77 = vector.load %arg11[%c0_77, %c1_78, %c0_79, %c0_80] : memref<1x2x128x128xf32, #tpu.memory_space<vmem>>, vector<1x1x128x128xf32>
    %78 = vector.shape_cast %77 : vector<1x1x128x128xf32> to vector<128x128xf32>
    %cst_81 = arith.constant 5.000000e-01 : f32
    %79 = vector.broadcast %cst_81 : f32 to vector<128x128xf32>
    %80 = arith.mulf %79, %78 : vector<128x128xf32>
    %81 = arith.subf %76, %80 : vector<128x128xf32>
    %cst_82 = arith.constant 7.500000e-01 : f32
    %82 = vector.broadcast %cst_82 : f32 to vector<128x128xf32>
    %83 = arith.addf %81, %82 : vector<128x128xf32>
    %84 = arith.truncf %83 : vector<128x128xf32> to vector<128x128xbf16>
    %c0_83 = arith.constant 0 : index
    %c0_84 = arith.constant 0 : index
    %85 = vector.load %arg6[%c0_83, %c0_84] : memref<64x128xbf16, #tpu.memory_space<vmem>>, vector<64x128xbf16>
    %cst_85 = arith.constant dense<0.000000e+00> : vector<64x128xf32>
    %86 = tpu.matmul %85, %84, %cst_85 {dimension_numbers = #tpu.dot_dimension_numbers<[1], [0], [0], [1], [0, 0, 1, 1], [], []>} : vector<64x128xbf16>, vector<128x128xbf16>, vector<64x128xf32> -> vector<64x128xf32>
    %87 = arith.truncf %86 : vector<64x128xf32> to vector<64x128xbf16>
    %c0_86 = arith.constant 0 : index
    %c0_87 = arith.constant 0 : index
    %88 = vector.load %arg7[%c0_86, %c0_87] : memref<128x128xbf16, #tpu.memory_space<vmem>>, vector<128x128xbf16>
    %cst_88 = arith.constant dense<0.000000e+00> : vector<64x128xf32>
    %89 = tpu.matmul %87, %88, %cst_88 {dimension_numbers = #tpu.dot_dimension_numbers<[1], [0], [0], [1], [0, 0, 1, 1], [], []>} : vector<64x128xbf16>, vector<128x128xbf16>, vector<64x128xf32> -> vector<64x128xf32>
    %90 = arith.mulf %89, %89 : vector<64x128xf32>
    %91 = vector.shape_cast %90 : vector<64x128xf32> to vector<1x64x128xf32>
    %cst_89 = arith.constant dense<0.000000e+00> : vector<1xf32>
    %92 = vector.multi_reduction <add>, %91, %cst_89 [1, 2] : vector<1x64x128xf32> to vector<1xf32>
    %93 = vector.shape_cast %92 : vector<1xf32> to vector<1x1x1xf32>
    %94 = vector.extract %93[0, 0, 0] : f32 from vector<1x1x1xf32>
    %95 = arith.mulf %94, %50 : f32
    %96 = arith.subf %52, %95 : f32
    %cst_90 = arith.constant 0.000000e+00 : f32
    %97 = arith.addf %cst_90, %96 : f32
    %98 = arith.index_cast %arg0 : i32 to index
    %99 = memref.load %arg8[%98] : memref<1xf32, #tpu.memory_space<smem>>
    memref.store %97, %arg8[%98] : memref<1xf32, #tpu.memory_space<smem>>
    return
  }
  func.func @transform_0(%arg0: i32, %arg1: memref<1xi32, #tpu.memory_space<smem>>) -> (i32, i32) {
    %c0_i32 = arith.constant 0 : i32
    %c0_i32_0 = arith.constant 0 : i32
    %c0_i32_1 = arith.constant 0 : i32
    return %c0_i32, %c0_i32_0 : i32, i32
  }
  func.func @transform_4(%arg0: i32, %arg1: memref<1xi32, #tpu.memory_space<smem>>) -> (i32, i32) {
    %c0_i32 = arith.constant 0 : i32
    %c0_i32_0 = arith.constant 0 : i32
    %c0_i32_1 = arith.constant 0 : i32
    return %c0_i32, %c0_i32_0 : i32, i32
  }
  func.func @transform_5(%arg0: i32, %arg1: memref<1xi32, #tpu.memory_space<smem>>) -> (i32, i32) {
    %c0_i32 = arith.constant 0 : i32
    %c0_i32_0 = arith.constant 0 : i32
    %c0_i32_1 = arith.constant 0 : i32
    return %c0_i32, %c0_i32_0 : i32, i32
  }
  func.func @transform_6(%arg0: i32, %arg1: memref<1xi32, #tpu.memory_space<smem>>) -> i32 {
    %c0_i32 = arith.constant 0 : i32
    %c0_i32_0 = arith.constant 0 : i32
    return %c0_i32 : i32
  }
}

</mosaic_0001>

<llo_original>
// kernel: physics_incorporated_forward.1
$region0: #{physics_incorporated_forward.1}
  #allocation0 [shape = 'u32[]', space=smem, size = 0x4, offset = 0x4, fixed_abs, tag = 'smem constant byte address 0x4 - core index']
  #allocation1 [shape = 'u32[72,128]{1,0:T(1,128)}', space=vmem, size = 0x9000, scoped, tag = 'internal scratch']
  #allocation2 [shape = 'f32[1,2,128,128]{3,2,1,0:T(8,128)}', space=vmem, size = 0x20000, scoped, tag = 'scratch operand']
  #allocation3 [shape = 'f32[1,2,128,128]{3,2,1,0:T(8,128)}', space=vmem, size = 0x20000, scoped, tag = 'scratch operand']
  #allocation4 [shape = 'f32[1,2,128,128]{3,2,1,0:T(8,128)}', space=vmem, size = 0x20000, scoped, tag = 'scratch operand']
  #allocation5 [shape = 's32[3]{0}', space=sflag, size = 0xc, scoped, tag = 'scratch operand']
  #allocation6 [shape = 's32[1]{0}', space=sflag, size = 0x4, scoped, tag = 'scoped memory for physics_incorporated_forward.1']
  #allocation7 [shape = 's32[1]{0:T(128)S(6)}', space=smem, size = 0x200, scoped, tag = 'prefetched SMEM operand 0']
  #allocation12 [shape = 's32[]', space=sflag, size = 0x4, offset = 0, fixed_abs, tag = 'sflag constant byte address 0x0 - dummy sync flag']
  #allocation13 [shape = 's32[]', space=sflag, size = 0x4, offset = 0, fixed_abs, tag = 'sflag constant byte address 0x0 - dummy sync flag']
  #allocation14 [shape = 'u32[]', space=smem, size = 0x4, offset = 0x44, fixed_abs, tag = 'smem constant byte address 0x44 - assertion arg 0']
  #allocation15 [shape = 'u32[]', space=smem, size = 0x4, offset = 0x48, fixed_abs, tag = 'smem constant byte address 0x48 - assertion arg 1']
  #allocation16 [shape = 's32[]', space=sflag, size = 0x4, offset = 0, fixed_abs, tag = 'sflag constant byte address 0x0 - dummy sync flag']
  #allocation17 [shape = 's32[]', space=sflag, size = 0x4, offset = 0, fixed_abs, tag = 'sflag constant byte address 0x0 - dummy sync flag']
  #allocation18 [shape = 's32[]', space=sflag, size = 0x4, offset = 0, fixed_abs, tag = 'sflag constant byte address 0x0 - dummy sync flag']
  #allocation19 [shape = 's32[]', space=sflag, size = 0x4, offset = 0, fixed_abs, tag = 'sflag constant byte address 0x0 - dummy sync flag']
  %s0 = inlined_call_operand.<no memory space> [shape: s32[1], index: 0, kind: input, shape index: {}]
  %s1 = inlined_call_operand.vmem [shape: f32[1,8], index: 1, kind: input, shape index: {}]
  %s2 = inlined_call_operand.hbm [shape: f32[4,2,128,128], index: 2, kind: input, shape index: {}]
  %s3 = inlined_call_operand.hbm [shape: f32[4,2,128,128], index: 3, kind: input, shape index: {}]
  %s4 = inlined_call_operand.hbm [shape: f32[4,2,128,128], index: 4, kind: input, shape index: {}]
  %s5 = inlined_call_operand.vmem [shape: bf16[64,128], index: 5, kind: input, shape index: {}]
  %s6 = inlined_call_operand.vmem [shape: bf16[128,128], index: 6, kind: input, shape index: {}]
  %s7 = inlined_call_operand.hbm [shape: f32[1], index: 7, kind: output, shape index: {}]
  %s8 = sld [smem:[#allocation0]]
  $region38: #{physics_incorporated_forward.1} parent=0
    _
  %s10 = ssub.s32 1, %s8
  %s11 = scalar_select 0, %s10, %s8
  %12 = sst [smem:[#allocation7]] %s0
  $region1: #{physics_incorporated_forward.1} parent=0
    #allocation8 [shape = 'u8[512]{0}', space=smem, size = 0x200, scoped, tag = 'input window, operand 1, single buffered']
    #allocation9 [shape = 's32[1]{0}', space=sflag, size = 0x4, scoped, tag = 'scoped memory for physics_incorporated_forward.1']
    #allocation10 [shape = 's32[1]{0}', space=sflag, size = 0x4, scoped, tag = 'scoped memory for physics_incorporated_forward.1']
    #allocation11 [shape = 'u8[512]{0}', space=smem, size = 0x200, scoped, tag = 'output window, operand 0, single buffered']
    %13 = vsyncpa [#allocation10], 0
    %14 = vsyncpa [#allocation9], 0
    // Predicated region
    $region2: #{physics_incorporated_forward.1} parent=1 // pred_check
      _
    $region3: #{physics_incorporated_forward.1} parent=1 // pred_check_branch
      %16 = sbr.rel (0) target = $region5
    $region4: #{physics_incorporated_forward.1} parent=1 // pred_region
      %18 = vsyncadd [#allocation10], 0
      %s20 = sshll.u32 %s1, 4
      %s21 = int_to_ptr.vmem [resolvable:$true] %s20
      %23 = dma.vmem_to_smem %s21, 16, [#allocation8], [#allocation10]
    $region5: #{physics_incorporated_forward.1} parent=1 // pred_fallthru
      _
    // Predicated region
    $region6: #{physics_incorporated_forward.1} parent=1 // pred_check
      _
    $region7: #{physics_incorporated_forward.1} parent=1 // pred_check_branch
      %25 = sbr.rel (0) target = $region9
    $region8: #{physics_incorporated_forward.1} parent=1 // pred_region
      _
    $region9: #{physics_incorporated_forward.1} parent=1 // pred_fallthru
      _
    // Predicated region
    $region10: #{physics_incorporated_forward.1} parent=1 // pred_check
      _
    $region11: #{physics_incorporated_forward.1} parent=1 // pred_check_branch
      %27 = sbr.rel (0) target = $region13
    $region12: #{physics_incorporated_forward.1} parent=1 // pred_region
      _
    $region13: #{physics_incorporated_forward.1} parent=1 // pred_fallthru
      _
    // Predicated region
    $region14: #{physics_incorporated_forward.1} parent=1 // pred_check
      _
    $region15: #{physics_incorporated_forward.1} parent=1 // pred_check_branch
      %29 = sbr.rel (0) target = $region17
    $region16: #{physics_incorporated_forward.1} parent=1 // pred_region
      %31 = dma.done [#allocation10], 16
    $region17: #{physics_incorporated_forward.1} parent=1 // pred_fallthru
      _
    %32 = sfence
    %s33 = sld [smem:[#allocation7]]
    %s34 = smul.u32 %s33, 256
    %s35 = scalar_lea.hbm %s2, %s34
    // Predicated region
    $region18: #{physics_incorporated_forward.1} parent=1 // pred_check
      _
    $region19: #{physics_incorporated_forward.1} parent=1 // pred_check_branch
      %37 = sbr.rel target = $region21
    $region20: #{physics_incorporated_forward.1} parent=1 // pred_region
      %38 = sst [smem:[#allocation14]] [#allocation13]
      %39 = sst [smem:[#allocation15]] [#allocation12]
    $region21: #{physics_incorporated_forward.1} parent=1 // pred_fallthru
      _
    %41 = shalt.err (0)
    %s43 = sshll.u32 %s35, 4
    %s44 = int_to_ptr.hbm [resolvable:$true] %s43
    %s45 = sshll.u32 [#allocation2], 4
    %s46 = int_to_ptr.vmem [resolvable:$true] %s45
    %48 = dma.hbm_to_vmem [thread:$0]  %s44, 4096, %s46, [#allocation5]
    %s49 = scalar_lea.hbm %s3, %s34
    %s50 = scalar_lea.sflag [#allocation5], 1
    // Predicated region
    $region22: #{physics_incorporated_forward.1} parent=1 // pred_check
      _
    $region23: #{physics_incorporated_forward.1} parent=1 // pred_check_branch
      %52 = sbr.rel target = $region25
    $region24: #{physics_incorporated_forward.1} parent=1 // pred_region
      %53 = sst [smem:[#allocation14]] [#allocation17]
      %54 = sst [smem:[#allocation15]] [#allocation16]
    $region25: #{physics_incorporated_forward.1} parent=1 // pred_fallthru
      _
    %56 = shalt.err (0)
    %s58 = sshll.u32 %s49, 4
    %s59 = int_to_ptr.hbm [resolvable:$true] %s58
    %s60 = sshll.u32 [#allocation3], 4
    %s61 = int_to_ptr.vmem [resolvable:$true] %s60
    %63 = dma.hbm_to_vmem [thread:$0]  %s59, 4096, %s61, %s50
    %s64 = scalar_lea.hbm %s4, %s34
    %s65 = scalar_lea.sflag [#allocation5], 2
    // Predicated region
    $region26: #{physics_incorporated_forward.1} parent=1 // pred_check
      _
    $region27: #{physics_incorporated_forward.1} parent=1 // pred_check_branch
      %67 = sbr.rel target = $region29
    $region28: #{physics_incorporated_forward.1} parent=1 // pred_region
      %68 = sst [smem:[#allocation14]] [#allocation19]
      %69 = sst [smem:[#allocation15]] [#allocation18]
    $region29: #{physics_incorporated_forward.1} parent=1 // pred_fallthru
      _
    %71 = shalt.err (0)
    %s73 = sshll.u32 %s64, 4
    %s74 = int_to_ptr.hbm [resolvable:$true] %s73
    %s75 = sshll.u32 [#allocation4], 4
    %s76 = int_to_ptr.vmem [resolvable:$true] %s75
    %78 = dma.hbm_to_vmem [thread:$0]  %s74, 4096, %s76, %s65
    %s79 = smul.u32 2, 128
    %s80 = smul.u32 %s79, 1
    %s81 = sshll.u32 %s80, 4
    %82 = dma.done [#allocation5], %s81
    %s83 = sshll.u32 %s80, 4
    %84 = dma.done %s50, %s83
    %s85 = sshll.u32 %s80, 4
    %86 = dma.done %s65, %s85
    %s87 = smul.u32 0, 128
    %s88 = sld [smem:[#allocation8 + %s87]]
    %s89 = sadd.s32 %s87, 1
    %s90 = sld [smem:[#allocation8 + %s89]]
    %s91 = sadd.s32 %s87, 2
    %s92 = sld [smem:[#allocation8 + %s91]]
    %s93 = sadd.s32 %s87, 3
    %s94 = sld [smem:[#allocation8 + %s93]]
    %s95 = sadd.s32 %s87, 4
    %s96 = sld [smem:[#allocation8 + %s95]]
    %s97 = sadd.s32 %s87, 5
    %s98 = sld [smem:[#allocation8 + %s97]]
    %v99 = vld [vmem:[#allocation2] sm:$0xff]
    %v100 = vld [vmem:[#allocation2 + $0x8] sm:$0xff]
    %v101 = vld [vmem:[#allocation2 + $0x10] sm:$0xff]
    %v102 = vld [vmem:[#allocation2 + $0x18] sm:$0xff]
    %v103 = vld [vmem:[#allocation2 + $0x20] sm:$0xff]
    %v104 = vld [vmem:[#allocation2 + $0x28] sm:$0xff]
    %v105 = vld [vmem:[#allocation2 + $0x30] sm:$0xff]
    %v106 = vld [vmem:[#allocation2 + $0x38] sm:$0xff]
    %v107 = vld [vmem:[#allocation2 + $0x40] sm:$0xff]
    %v108 = vld [vmem:[#allocation2 + $0x48] sm:$0xff]
    %v109 = vld [vmem:[#allocation2 + $0x50] sm:$0xff]
    %v110 = vld [vmem:[#allocation2 + $0x58] sm:$0xff]
    %v111 = vld [vmem:[#allocation2 + $0x60] sm:$0xff]
    %v112 = vld [vmem:[#allocation2 + $0x68] sm:$0xff]
    %v113 = vld [vmem:[#allocation2 + $0x70] sm:$0xff]
    %v114 = vld [vmem:[#allocation2 + $0x78] sm:$0xff]
    %v115 = vstv %s88
    %v116 = vmul.f32 %v115, %v99
    %v117 = vmul.f32 %v115, %v100
    %v118 = vmul.f32 %v115, %v101
    %v119 = vmul.f32 %v115, %v102
    %v120 = vmul.f32 %v115, %v103
    %v121 = vmul.f32 %v115, %v104
    %v122 = vmul.f32 %v115, %v105
    %v123 = vmul.f32 %v115, %v106
    %v124 = vmul.f32 %v115, %v107
    %v125 = vmul.f32 %v115, %v108
    %v126 = vmul.f32 %v115, %v109
    %v127 = vmul.f32 %v115, %v110
    %v128 = vmul.f32 %v115, %v111
    %v129 = vmul.f32 %v115, %v112
    %v130 = vmul.f32 %v115, %v113
    %v131 = vmul.f32 %v115, %v114
    %s132 = scalar_lea.vmem [#allocation2], 128
    %v133 = vld [vmem:[%s132] sm:$0xff]
    %v134 = vld [vmem:[%s132 + $0x8] sm:$0xff]
    %v135 = vld [vmem:[%s132 + $0x10] sm:$0xff]
    %v136 = vld [vmem:[%s132 + $0x18] sm:$0xff]
    %v137 = vld [vmem:[%s132 + $0x20] sm:$0xff]
    %v138 = vld [vmem:[%s132 + $0x28] sm:$0xff]
    %v139 = vld [vmem:[%s132 + $0x30] sm:$0xff]
    %v140 = vld [vmem:[%s132 + $0x38] sm:$0xff]
    %v141 = vld [vmem:[%s132 + $0x40] sm:$0xff]
    %v142 = vld [vmem:[%s132 + $0x48] sm:$0xff]
    %v143 = vld [vmem:[%s132 + $0x50] sm:$0xff]
    %v144 = vld [vmem:[%s132 + $0x58] sm:$0xff]
    %v145 = vld [vmem:[%s132 + $0x60] sm:$0xff]
    %v146 = vld [vmem:[%s132 + $0x68] sm:$0xff]
    %v147 = vld [vmem:[%s132 + $0x70] sm:$0xff]
    %v148 = vld [vmem:[%s132 + $0x78] sm:$0xff]
    %v149 = vstv %s90
    %v150 = vmul.f32 %v149, %v133
    %v151 = vmul.f32 %v149, %v134
    %v152 = vmul.f32 %v149, %v135
    %v153 = vmul.f32 %v149, %v136
    %v154 = vmul.f32 %v149, %v137
    %v155 = vmul.f32 %v149, %v138
    %v156 = vmul.f32 %v149, %v139
    %v157 = vmul.f32 %v149, %v140
    %v158 = vmul.f32 %v149, %v141
    %v159 = vmul.f32 %v149, %v142
    %v160 = vmul.f32 %v149, %v143
    %v161 = vmul.f32 %v149, %v144
    %v162 = vmul.f32 %v149, %v145
    %v163 = vmul.f32 %v149, %v146
    %v164 = vmul.f32 %v149, %v147
    %v165 = vmul.f32 %v149, %v148
    %v166 = vadd.f32 %v116, %v150
    %v167 = vadd.f32 %v117, %v151
    %v168 = vadd.f32 %v118, %v152
    %v169 = vadd.f32 %v119, %v153
    %v170 = vadd.f32 %v120, %v154
    %v171 = vadd.f32 %v121, %v155
    %v172 = vadd.f32 %v122, %v156
    %v173 = vadd.f32 %v123, %v157
    %v174 = vadd.f32 %v124, %v158
    %v175 = vadd.f32 %v125, %v159
    %v176 = vadd.f32 %v126, %v160
    %v177 = vadd.f32 %v127, %v161
    %v178 = vadd.f32 %v128, %v162
    %v179 = vadd.f32 %v129, %v163
    %v180 = vadd.f32 %v130, %v164
    %v181 = vadd.f32 %v131, %v165
    %v182 = vld [vmem:[#allocation3] sm:$0xff]
    %v183 = vld [vmem:[#allocation3 + $0x8] sm:$0xff]
    %v184 = vld [vmem:[#allocation3 + $0x10] sm:$0xff]
    %v185 = vld [vmem:[#allocation3 + $0x18] sm:$0xff]
    %v186 = vld [vmem:[#allocation3 + $0x20] sm:$0xff]
    %v187 = vld [vmem:[#allocation3 + $0x28] sm:$0xff]
    %v188 = vld [vmem:[#allocation3 + $0x30] sm:$0xff]
    %v189 = vld [vmem:[#allocation3 + $0x38] sm:$0xff]
    %v190 = vld [vmem:[#allocation3 + $0x40] sm:$0xff]
    %v191 = vld [vmem:[#allocation3 + $0x48] sm:$0xff]
    %v192 = vld [vmem:[#allocation3 + $0x50] sm:$0xff]
    %v193 = vld [vmem:[#allocation3 + $0x58] sm:$0xff]
    %v194 = vld [vmem:[#allocation3 + $0x60] sm:$0xff]
    %v195 = vld [vmem:[#allocation3 + $0x68] sm:$0xff]
    %v196 = vld [vmem:[#allocation3 + $0x70] sm:$0xff]
    %v197 = vld [vmem:[#allocation3 + $0x78] sm:$0xff]
    %v198 = vstv %s92
    %v199 = vmul.f32 %v198, %v182
    %v200 = vmul.f32 %v198, %v183
    %v201 = vmul.f32 %v198, %v184
    %v202 = vmul.f32 %v198, %v185
    %v203 = vmul.f32 %v198, %v186
    %v204 = vmul.f32 %v198, %v187
    %v205 = vmul.f32 %v198, %v188
    %v206 = vmul.f32 %v198, %v189
    %v207 = vmul.f32 %v198, %v190
    %v208 = vmul.f32 %v198, %v191
    %v209 = vmul.f32 %v198, %v192
    %v210 = vmul.f32 %v198, %v193
    %v211 = vmul.f32 %v198, %v194
    %v212 = vmul.f32 %v198, %v195
    %v213 = vmul.f32 %v198, %v196
    %v214 = vmul.f32 %v198, %v197
    %v215 = vadd.f32 %v166, %v199
    %v216 = vadd.f32 %v167, %v200
    %v217 = vadd.f32 %v168, %v201
    %v218 = vadd.f32 %v169, %v202
    %v219 = vadd.f32 %v170, %v203
    %v220 = vadd.f32 %v171, %v204
    %v221 = vadd.f32 %v172, %v205
    %v222 = vadd.f32 %v173, %v206
    %v223 = vadd.f32 %v174, %v207
    %v224 = vadd.f32 %v175, %v208
    %v225 = vadd.f32 %v176, %v209
    %v226 = vadd.f32 %v177, %v210
    %v227 = vadd.f32 %v178, %v211
    %v228 = vadd.f32 %v179, %v212
    %v229 = vadd.f32 %v180, %v213
    %v230 = vadd.f32 %v181, %v214
    %s231 = scalar_lea.vmem [#allocation3], 128
    %v232 = vld [vmem:[%s231] sm:$0xff]
    %v233 = vld [vmem:[%s231 + $0x8] sm:$0xff]
    %v234 = vld [vmem:[%s231 + $0x10] sm:$0xff]
    %v235 = vld [vmem:[%s231 + $0x18] sm:$0xff]
    %v236 = vld [vmem:[%s231 + $0x20] sm:$0xff]
    %v237 = vld [vmem:[%s231 + $0x28] sm:$0xff]
    %v238 = vld [vmem:[%s231 + $0x30] sm:$0xff]
    %v239 = vld [vmem:[%s231 + $0x38] sm:$0xff]
    %v240 = vld [vmem:[%s231 + $0x40] sm:$0xff]
    %v241 = vld [vmem:[%s231 + $0x48] sm:$0xff]
    %v242 = vld [vmem:[%s231 + $0x50] sm:$0xff]
    %v243 = vld [vmem:[%s231 + $0x58] sm:$0xff]
    %v244 = vld [vmem:[%s231 + $0x60] sm:$0xff]
    %v245 = vld [vmem:[%s231 + $0x68] sm:$0xff]
    %v246 = vld [vmem:[%s231 + $0x70] sm:$0xff]
    %v247 = vld [vmem:[%s231 + $0x78] sm:$0xff]
    %v248 = vstv %s94
    %v249 = vmul.f32 %v248, %v232
    %v250 = vmul.f32 %v248, %v233
    %v251 = vmul.f32 %v248, %v234
    %v252 = vmul.f32 %v248, %v235
    %v253 = vmul.f32 %v248, %v236
    %v254 = vmul.f32 %v248, %v237
    %v255 = vmul.f32 %v248, %v238
    %v256 = vmul.f32 %v248, %v239
    %v257 = vmul.f32 %v248, %v240
    %v258 = vmul.f32 %v248, %v241
    %v259 = vmul.f32 %v248, %v242
    %v260 = vmul.f32 %v248, %v243
    %v261 = vmul.f32 %v248, %v244
    %v262 = vmul.f32 %v248, %v245
    %v263 = vmul.f32 %v248, %v246
    %v264 = vmul.f32 %v248, %v247
    %v265 = vadd.f32 %v215, %v249
    %v266 = vadd.f32 %v216, %v250
    %v267 = vadd.f32 %v217, %v251
    %v268 = vadd.f32 %v218, %v252
    %v269 = vadd.f32 %v219, %v253
    %v270 = vadd.f32 %v220, %v254
    %v271 = vadd.f32 %v221, %v255
    %v272 = vadd.f32 %v222, %v256
    %v273 = vadd.f32 %v223, %v257
    %v274 = vadd.f32 %v224, %v258
    %v275 = vadd.f32 %v225, %v259
    %v276 = vadd.f32 %v226, %v260
    %v277 = vadd.f32 %v227, %v261
    %v278 = vadd.f32 %v228, %v262
    %v279 = vadd.f32 %v229, %v263
    %v280 = vadd.f32 %v230, %v264
    %v281 = vld [vmem:[#allocation4] sm:$0xff]
    %v282 = vld [vmem:[#allocation4 + $0x8] sm:$0xff]
    %v283 = vld [vmem:[#allocation4 + $0x10] sm:$0xff]
    %v284 = vld [vmem:[#allocation4 + $0x18] sm:$0xff]
    %v285 = vld [vmem:[#allocation4 + $0x20] sm:$0xff]
    %v286 = vld [vmem:[#allocation4 + $0x28] sm:$0xff]
    %v287 = vld [vmem:[#allocation4 + $0x30] sm:$0xff]
    %v288 = vld [vmem:[#allocation4 + $0x38] sm:$0xff]
    %v289 = vld [vmem:[#allocation4 + $0x40] sm:$0xff]
    %v290 = vld [vmem:[#allocation4 + $0x48] sm:$0xff]
    %v291 = vld [vmem:[#allocation4 + $0x50] sm:$0xff]
    %v292 = vld [vmem:[#allocation4 + $0x58] sm:$0xff]
    %v293 = vld [vmem:[#allocation4 + $0x60] sm:$0xff]
    %v294 = vld [vmem:[#allocation4 + $0x68] sm:$0xff]
    %v295 = vld [vmem:[#allocation4 + $0x70] sm:$0xff]
    %v296 = vld [vmem:[#allocation4 + $0x78] sm:$0xff]
    %v297 = vsub.f32 %v265, %v281
    %v298 = vsub.f32 %v266, %v282
    %v299 = vsub.f32 %v267, %v283
    %v300 = vsub.f32 %v268, %v284
    %v301 = vsub.f32 %v269, %v285
    %v302 = vsub.f32 %v270, %v286
    %v303 = vsub.f32 %v271, %v287
    %v304 = vsub.f32 %v272, %v288
    %v305 = vsub.f32 %v273, %v289
    %v306 = vsub.f32 %v274, %v290
    %v307 = vsub.f32 %v275, %v291
    %v308 = vsub.f32 %v276, %v292
    %v309 = vsub.f32 %v277, %v293
    %v310 = vsub.f32 %v278, %v294
    %v311 = vsub.f32 %v279, %v295
    %v312 = vsub.f32 %v280, %v296
    %s313 = scalar_lea.vmem [#allocation4], 128
    %v314 = vld [vmem:[%s313] sm:$0xff]
    %v315 = vld [vmem:[%s313 + $0x8] sm:$0xff]
    %v316 = vld [vmem:[%s313 + $0x10] sm:$0xff]
    %v317 = vld [vmem:[%s313 + $0x18] sm:$0xff]
    %v318 = vld [vmem:[%s313 + $0x20] sm:$0xff]
    %v319 = vld [vmem:[%s313 + $0x28] sm:$0xff]
    %v320 = vld [vmem:[%s313 + $0x30] sm:$0xff]
    %v321 = vld [vmem:[%s313 + $0x38] sm:$0xff]
    %v322 = vld [vmem:[%s313 + $0x40] sm:$0xff]
    %v323 = vld [vmem:[%s313 + $0x48] sm:$0xff]
    %v324 = vld [vmem:[%s313 + $0x50] sm:$0xff]
    %v325 = vld [vmem:[%s313 + $0x58] sm:$0xff]
    %v326 = vld [vmem:[%s313 + $0x60] sm:$0xff]
    %v327 = vld [vmem:[%s313 + $0x68] sm:$0xff]
    %v328 = vld [vmem:[%s313 + $0x70] sm:$0xff]
    %v329 = vld [vmem:[%s313 + $0x78] sm:$0xff]
    %v330 = vmul.f32 %v314, 0.5
    %v331 = vmul.f32 %v315, 0.5
    %v332 = vmul.f32 %v316, 0.5
    %v333 = vmul.f32 %v317, 0.5
    %v334 = vmul.f32 %v318, 0.5
    %v335 = vmul.f32 %v319, 0.5
    %v336 = vmul.f32 %v320, 0.5
    %v337 = vmul.f32 %v321, 0.5
    %v338 = vmul.f32 %v322, 0.5
    %v339 = vmul.f32 %v323, 0.5
    %v340 = vmul.f32 %v324, 0.5
    %v341 = vmul.f32 %v325, 0.5
    %v342 = vmul.f32 %v326, 0.5
    %v343 = vmul.f32 %v327, 0.5
    %v344 = vmul.f32 %v328, 0.5
    %v345 = vmul.f32 %v329, 0.5
    %v346 = vsub.f32 %v297, %v330
    %v347 = vsub.f32 %v298, %v331
    %v348 = vsub.f32 %v299, %v332
    %v349 = vsub.f32 %v300, %v333
    %v350 = vsub.f32 %v301, %v334
    %v351 = vsub.f32 %v302, %v335
    %v352 = vsub.f32 %v303, %v336
    %v353 = vsub.f32 %v304, %v337
    %v354 = vsub.f32 %v305, %v338
    %v355 = vsub.f32 %v306, %v339
    %v356 = vsub.f32 %v307, %v340
    %v357 = vsub.f32 %v308, %v341
    %v358 = vsub.f32 %v309, %v342
    %v359 = vsub.f32 %v310, %v343
    %v360 = vsub.f32 %v311, %v344
    %v361 = vsub.f32 %v312, %v345
    %v362 = vadd.f32 %v346, 0.75
    %v363 = vadd.f32 %v347, 0.75
    %v364 = vadd.f32 %v348, 0.75
    %v365 = vadd.f32 %v349, 0.75
    %v366 = vadd.f32 %v350, 0.75
    %v367 = vadd.f32 %v351, 0.75
    %v368 = vadd.f32 %v352, 0.75
    %v369 = vadd.f32 %v353, 0.75
    %v370 = vadd.f32 %v354, 0.75
    %v371 = vadd.f32 %v355, 0.75
    %v372 = vadd.f32 %v356, 0.75
    %v373 = vadd.f32 %v357, 0.75
    %v374 = vadd.f32 %v358, 0.75
    %v375 = vadd.f32 %v359, 0.75
    %v376 = vadd.f32 %v360, 0.75
    %v377 = vadd.f32 %v361, 0.75
    %v378 = vpack.c.bf16 %v363, %v362
    %v379 = vpack.c.bf16 %v365, %v364
    %v380 = vpack.c.bf16 %v367, %v366
    %v381 = vpack.c.bf16 %v369, %v368
    %v382 = vpack.c.bf16 %v371, %v370
    %v383 = vpack.c.bf16 %v373, %v372
    %v384 = vpack.c.bf16 %v375, %v374
    %v385 = vpack.c.bf16 %v377, %v376
    %v386 = vld [vmem:[%s5] sm:$0xf]
    %v387 = vld [vmem:[%s5 + $0x4] sm:$0xf]
    %v388 = vld [vmem:[%s5 + $0x8] sm:$0xf]
    %v389 = vld [vmem:[%s5 + $0xc] sm:$0xf]
    %v390 = vld [vmem:[%s5 + $0x10] sm:$0xf]
    %v391 = vld [vmem:[%s5 + $0x14] sm:$0xf]
    %v392 = vld [vmem:[%s5 + $0x18] sm:$0xf]
    %v393 = vld [vmem:[%s5 + $0x1c] sm:$0xf]
    %v402 = vunpack.c.l.b16 %v386
    %v403 = vunpack.c.l.b16 %v387
    %v404 = vunpack.c.l.b16 %v388
    %v405 = vunpack.c.l.b16 %v389
    %v406 = vunpack.c.l.b16 %v390
    %v407 = vunpack.c.l.b16 %v391
    %v408 = vunpack.c.l.b16 %v392
    %v409 = vunpack.c.l.b16 %v393
    %v410 = vpack.c.b16 %v403, %v402
    %v411 = vpack.c.b16 %v405, %v404
    %v412 = vpack.c.b16 %v407, %v406
    %v413 = vpack.c.b16 %v409, %v408
    %418 = vmatpush.bf16.msra.mxu0 %v385
    %419 = vmatpush.bf16.msra.mxu0 %v384
    %420 = vmatpush.bf16.msra.mxu0 %v383
    %421 = vmatpush.bf16.msra.mxu0 %v382
    %422 = vmatpush.bf16.msra.mxu0 %v381
    %423 = vmatpush.bf16.msra.mxu0 %v380
    %424 = vmatpush.bf16.msra.mxu0 %v379
    %425 = vmatpush.bf16.msra.mxu0 %v378
    %426 = vmatmul.bf16.gmra.mxu0 %v410
    %v427 = vpop.f32.mrf.mxu0
    %v428 = vadd.f32 0.0, %v427
    %v429 = vpop.f32.mrf.mxu0
    %v430 = vadd.f32 0.0, %v429
    %431 = vmatmul.bf16.gmra.mxu0 %v411
    %v432 = vpop.f32.mrf.mxu0
    %v433 = vadd.f32 0.0, %v432
    %v434 = vpop.f32.mrf.mxu0
    %v435 = vadd.f32 0.0, %v434
    %436 = vmatmul.bf16.gmra.mxu0 %v412
    %v437 = vpop.f32.mrf.mxu0
    %v438 = vadd.f32 0.0, %v437
    %v439 = vpop.f32.mrf.mxu0
    %v440 = vadd.f32 0.0, %v439
    %441 = vmatmul.bf16.gmra.mxu0 %v413
    %v442 = vpop.f32.mrf.mxu0
    %v443 = vadd.f32 0.0, %v442
    %v444 = vpop.f32.mrf.mxu0
    %v445 = vadd.f32 0.0, %v444
    %446 = vdwg.mxu0
    %v447 = vpack.c.bf16 %v430, %v428
    %v448 = vpack.c.bf16 %v435, %v433
    %v449 = vpack.c.bf16 %v440, %v438
    %v450 = vpack.c.bf16 %v445, %v443
    %v451 = vld [vmem:[%s6] sm:$0xf]
    %v452 = vld [vmem:[%s6 + $0x4] sm:$0xf]
    %v453 = vld [vmem:[%s6 + $0x8] sm:$0xf]
    %v454 = vld [vmem:[%s6 + $0xc] sm:$0xf]
    %v455 = vld [vmem:[%s6 + $0x10] sm:$0xf]
    %v456 = vld [vmem:[%s6 + $0x14] sm:$0xf]
    %v457 = vld [vmem:[%s6 + $0x18] sm:$0xf]
    %v458 = vld [vmem:[%s6 + $0x1c] sm:$0xf]
    %v459 = vld [vmem:[%s6 + $0x20] sm:$0xf]
    %v460 = vld [vmem:[%s6 + $0x24] sm:$0xf]
    %v461 = vld [vmem:[%s6 + $0x28] sm:$0xf]
    %v462 = vld [vmem:[%s6 + $0x2c] sm:$0xf]
    %v463 = vld [vmem:[%s6 + $0x30] sm:$0xf]
    %v464 = vld [vmem:[%s6 + $0x34] sm:$0xf]
    %v465 = vld [vmem:[%s6 + $0x38] sm:$0xf]
    %v466 = vld [vmem:[%s6 + $0x3c] sm:$0xf]
    %v483 = vunpack.c.l.b16 %v451
    %v484 = vunpack.c.l.b16 %v452
    %v485 = vunpack.c.l.b16 %v453
    %v486 = vunpack.c.l.b16 %v454
    %v487 = vunpack.c.l.b16 %v455
    %v488 = vunpack.c.l.b16 %v456
    %v489 = vunpack.c.l.b16 %v457
    %v490 = vunpack.c.l.b16 %v458
    %v491 = vunpack.c.l.b16 %v459
    %v492 = vunpack.c.l.b16 %v460
    %v493 = vunpack.c.l.b16 %v461
    %v494 = vunpack.c.l.b16 %v462
    %v495 = vunpack.c.l.b16 %v463
    %v496 = vunpack.c.l.b16 %v464
    %v497 = vunpack.c.l.b16 %v465
    %v498 = vunpack.c.l.b16 %v466
    %v499 = vpack.c.b16 %v484, %v483
    %v500 = vpack.c.b16 %v486, %v485
    %v501 = vpack.c.b16 %v488, %v487
    %v502 = vpack.c.b16 %v490, %v489
    %v503 = vpack.c.b16 %v492, %v491
    %v504 = vpack.c.b16 %v494, %v493
    %v505 = vpack.c.b16 %v496, %v495
    %v506 = vpack.c.b16 %v498, %v497
    %515 = vmatpush.bf16.msra.mxu0 %v506
    %516 = vmatpush.bf16.msra.mxu0 %v505
    %517 = vmatpush.bf16.msra.mxu0 %v504
    %518 = vmatpush.bf16.msra.mxu0 %v503
    %519 = vmatpush.bf16.msra.mxu0 %v502
    %520 = vmatpush.bf16.msra.mxu0 %v501
    %521 = vmatpush.bf16.msra.mxu0 %v500
    %522 = vmatpush.bf16.msra.mxu0 %v499
    %523 = vmatmul.bf16.gmra.mxu0 %v447
    %v524 = vpop.f32.mrf.mxu0
    %v525 = vadd.f32 0.0, %v524
    %v526 = vpop.f32.mrf.mxu0
    %v527 = vadd.f32 0.0, %v526
    %528 = vmatmul.bf16.gmra.mxu0 %v448
    %v529 = vpop.f32.mrf.mxu0
    %v530 = vadd.f32 0.0, %v529
    %v531 = vpop.f32.mrf.mxu0
    %v532 = vadd.f32 0.0, %v531
    %533 = vmatmul.bf16.gmra.mxu0 %v449
    %v534 = vpop.f32.mrf.mxu0
    %v535 = vadd.f32 0.0, %v534
    %v536 = vpop.f32.mrf.mxu0
    %v537 = vadd.f32 0.0, %v536
    %538 = vmatmul.bf16.gmra.mxu0 %v450
    %v539 = vpop.f32.mrf.mxu0
    %v540 = vadd.f32 0.0, %v539
    %v541 = vpop.f32.mrf.mxu0
    %v542 = vadd.f32 0.0, %v541
    %543 = vdwg.mxu0
    %v544 = vmul.f32 %v525, %v525
    %v545 = vmul.f32 %v527, %v527
    %v546 = vmul.f32 %v530, %v530
    %v547 = vmul.f32 %v532, %v532
    %v548 = vmul.f32 %v535, %v535
    %v549 = vmul.f32 %v537, %v537
    %v550 = vmul.f32 %v540, %v540
    %v551 = vmul.f32 %v542, %v542
    %v552 = vadd.f32 %v544, %v545
    %v553 = vadd.f32 %v552, %v546
    %v554 = vadd.f32 %v553, %v547
    %v555 = vadd.f32 %v554, %v548
    %v556 = vadd.f32 %v555, %v549
    %v557 = vadd.f32 %v556, %v550
    %v558 = vadd.f32 %v557, %v551
    %559 = vadd.xlane.f32.xlu0 %v558
    %v560 = vpop.xlane.xlu0 %559
    %v561 = vrot.slane %v560, 4
    %v562 = vadd.f32 %v560, %v561
    %v563 = vrot.slane %v562, 2
    %v564 = vadd.f32 %v562, %v563
    %v565 = vrot.slane %v564, 1
    %v566 = vadd.f32 %v564, %v565
    %s567 = vtos %v566
    %s568 = smul.f32 %s567, %s96
    %s569 = ssub.f32 %s98, %s568
    %s570 = sadd.f32 %s569, 0.0
    %s571 = scalar_lea.smem [#allocation11], 0
    %572 = sst [smem:[%s571]] %s570
    // Predicated region
    $region30: #{physics_incorporated_forward.1} parent=1 // pred_check
      _
    $region31: #{physics_incorporated_forward.1} parent=1 // pred_check_branch
      %574 = sbr.rel (0) target = $region33
    $region32: #{physics_incorporated_forward.1} parent=1 // pred_region
      %576 = vsyncadd [#allocation9], 0
      %s578 = sshll.u32 %s7, 4
      %s579 = int_to_ptr.hbm [resolvable:$true] %s578
      %581 = dma.smem_to_hbm [#allocation11], 16, %s579, [#allocation9]
    $region33: #{physics_incorporated_forward.1} parent=1 // pred_fallthru
      _
    // Predicated region
    $region34: #{physics_incorporated_forward.1} parent=1 // pred_check
      _
    $region35: #{physics_incorporated_forward.1} parent=1 // pred_check_branch
      %583 = sbr.rel (0) target = $region37
    $region36: #{physics_incorporated_forward.1} parent=1 // pred_region
      %585 = dma.done [#allocation9], 16
    $region37: #{physics_incorporated_forward.1} parent=1 // pred_fallthru
      _
    %586 = sfence
    %587 = vsyncpa [#allocation9], 1
    %588 = vsyncpa [#allocation10], 1
  %589 = vsyncmov [#allocation5]
  %s590 = vpop.sfrf %589
  %p591 = scmp.eq.s32.totalorder %s590, 0
  %p592 = pneg %p591
  %594 = shalt.err (%p592)
  %s595 = scalar_lea.sflag [#allocation5], 1
  %596 = vsyncmov %s595
  %s597 = vpop.sfrf %596
  %p598 = scmp.eq.s32.totalorder %s597, 0
  %p599 = pneg %p598
  %601 = shalt.err (%p599)
  %s602 = scalar_lea.sflag [#allocation5], 2
  %603 = vsyncmov %s602
  %s604 = vpop.sfrf %603
  %p605 = scmp.eq.s32.totalorder %s604, 0
  %p606 = pneg %p605
  %608 = shalt.err (%p606)

</llo_original>
